<compile_context>
chip_gen: v6e
topology: v6e:2x2x1
jax: 0.10.0
libtpu: 0.0.40
codegen_flags: <defaults>
</compile_context>

<pallas_src>
import functools
from typing import Optional

import jax
import jax.numpy as jnp
from jax.experimental import pallas as pl
from jax.experimental.pallas import tpu as pltpu

_MIB = 1024 * 1024
_RESIDENT_VMEM_BUDGET = 40 * _MIB  # conservative vs v7x's 64 MiB physical VMEM


# ---------------------------------------------------------------------------
# Helpers
# ---------------------------------------------------------------------------
def _round_up(x: int, m: int) -> int:
    return ((x + m - 1) // m) * m


def _pad_to(a, shape):
    pads = [(0, s - d) for d, s in zip(a.shape, shape)]
    if all(p == (0, 0) for p in pads):
        return a
    return jnp.pad(a, pads)


@functools.lru_cache(maxsize=None)
def _buffered_one_supported() -> bool:
    """Probe once (eagerly) whether BlockSpec(pipeline_mode=pl.Buffered(1)) is
    supported, so grid-resident weights can be single-buffered (halves their
    VMEM cost). Falls back silently if unsupported."""
    if not hasattr(pl, "Buffered"):
        return False

    def _copy_kernel(x_ref, o_ref):
        o_ref[...] = x_ref[...]

    try:
        fn = pl.pallas_call(
            _copy_kernel,
            out_shape=jax.ShapeDtypeStruct((8, 128), jnp.float32),
            grid=(2,),
            in_specs=[pl.BlockSpec((8, 128), lambda i: (0, 0),
                                   pipeline_mode=pl.Buffered(1))],
            out_specs=pl.BlockSpec((8, 128), lambda i: (0, 0)),
        )
        jax.block_until_ready(fn(jnp.zeros((8, 128), jnp.float32)))
        return True
    except Exception:
        return False


def _weight_spec(shape, index_map, single_buffer: bool) -> pl.BlockSpec:
    """BlockSpec for a grid-resident operand (constant index_map)."""
    if single_buffer:
        return pl.BlockSpec(shape, index_map, pipeline_mode=pl.Buffered(1))
    return pl.BlockSpec(shape, index_map)


# ---------------------------------------------------------------------------
# Kernel A: weights fully VMEM-resident, one row-tile per grid step.
# ---------------------------------------------------------------------------
def _ffn_resident_kernel(x_ref, w1_ref, b1_ref, w2_ref, b2_ref, out_ref):
    x = x_ref[...].astype(jnp.bfloat16)                      # bf16 MXU operands
    h = jnp.dot(x, w1_ref[...], preferred_element_type=jnp.float32)
    h = jnp.maximum(h + b1_ref[...], 0.0)                    # f32 bias + ReLU (VPU)
    y = jnp.dot(h.astype(jnp.bfloat16), w2_ref[...],
                preferred_element_type=jnp.float32) + b2_ref[...]
    # TODO(synk): nn.Dropout is identity at inference; training-mode dropout
    # (pltpu.prng_random_bits mask) intentionally not implemented.
    out_ref[...] = y.astype(out_ref.dtype)


# ---------------------------------------------------------------------------
# Kernel B: H-tiled accumulator path for weights too large to keep resident.
# grid = (row tiles, H tiles); f32 accumulator lives in VMEM scratch.
# ---------------------------------------------------------------------------
def _ffn_htiled_kernel(x_ref, w1_ref, b1_ref, w2_ref, b2_ref, out_ref, acc_ref):
    h_idx = pl.program_id(1)

    @pl.when(h_idx == 0)
    def _init():
        acc_ref[...] = jnp.zeros_like(acc_ref)

    x = x_ref[...].astype(jnp.bfloat16)
    h = jnp.dot(x, w1_ref[...], preferred_element_type=jnp.float32)
    h = jnp.maximum(h + b1_ref[...], 0.0)       # ReLU is elementwise over H -> exact per tile
    acc_ref[...] += jnp.dot(h.astype(jnp.bfloat16), w2_ref[...],
                            preferred_element_type=jnp.float32)

    @pl.when(h_idx == pl.num_programs(1) - 1)
    def _finalize():
        out_ref[...] = (acc_ref[...] + b2_ref[...]).astype(out_ref.dtype)


# ---------------------------------------------------------------------------
# One-time parameter preparation (outside the per-call jit path).
# ---------------------------------------------------------------------------
def prepare_ffn_params(w1, b1, w2, b2):
    """w1: (C, 4C), b1: (4C,), w2: (4C, C), b2: (C,).
    Pads to lane-aligned (multiple of 128) shapes and casts weights to bf16.
    For realistic C (multiple of 64), H_pad is automatically a multiple of 256,
    filling the v6e/v7x 256x256 MXU tiles."""
    C, H = w1.shape
    C_pad = _round_up(max(C, 128), 128)
    H_pad = _round_up(max(H, 128), 128)
    w1_p = _pad_to(w1.astype(jnp.float32), (C_pad, H_pad)).astype(jnp.bfloat16)
    b1_p = _pad_to(b1.astype(jnp.float32).reshape(1, H), (1, H_pad))
    w2_p = _pad_to(w2.astype(jnp.float32), (H_pad, C_pad)).astype(jnp.bfloat16)
    b2_p = _pad_to(b2.astype(jnp.float32).reshape(1, C), (1, C_pad))
    return w1_p, b1_p, w2_p, b2_p


# ---------------------------------------------------------------------------
# Main entry point.
# ---------------------------------------------------------------------------
@functools.partial(
    jax.jit,
    static_argnames=("block_m", "block_h", "force_h_tiled", "single_buffer_weights"))
def _feed_forward_impl(x, w1_p, b1_p, w2_p, b2_p, *, block_m, block_h,
                       force_h_tiled, single_buffer_weights):
    orig_shape = x.shape
    C = orig_shape[-1]
    C_pad, H_pad = w1_p.shape

    x2 = x.reshape(-1, C)
    M = x2.shape[0]

    # Row tile: big (amortizes per-grid-step overhead and MXU weight pushes),
    # but always >= 2 tiles so v7x's two TensorCores both get work.
    TM = min(block_m, _round_up(M, 8))
    while M > 8 and _round_up(M, TM) // TM < 2 and TM > 8:
        TM = _round_up(TM // 2, 8)
    M_pad = _round_up(M, TM)

    # Skip padding when already aligned (common case M % TM == 0, C % 128 == 0).
    x_p = x2 if (M_pad, C_pad) == (M, C) else _pad_to(x2, (M_pad, C_pad))

    n_row_tiles = M_pad // TM
    wbuf = 1 if single_buffer_weights else 2
    itemsize = jnp.dtype(x.dtype).itemsize

    # VMEM residency estimate for the fully-resident path.
    resident_bytes = (
        wbuf * 2 * C_pad * H_pad * 2          # w1 + w2, bf16
        + wbuf * 4 * (H_pad + C_pad)          # biases, f32
        + 2 * 2 * TM * C_pad * itemsize       # x + out tiles, double-buffered
        + TM * H_pad * 6)                     # hidden intermediate (f32 + bf16)
    use_h_tiled = force_h_tiled or resident_bytes > _RESIDENT_VMEM_BUDGET

    flops = 4 * M_pad * C_pad * H_pad
    weight_bytes = 2 * C_pad * H_pad * 2 + 4 * (H_pad + C_pad)

    if not use_h_tiled:
        vmem_limit = int(min(max(1.5 * resident_bytes, 32 * _MIB), 64 * _MIB))
        cost = pl.CostEstimate(
            flops=flops, transcendentals=0,
            bytes_accessed=int(2 * M_pad * C_pad * itemsize + weight_bytes))
        out = pl.pallas_call(
            _ffn_resident_kernel,
            out_shape=jax.ShapeDtypeStruct((M_pad, C_pad), x.dtype),
            grid=(n_row_tiles,),
            in_specs=[
                pl.BlockSpec((TM, C_pad), lambda i: (i, 0)),                             # x row tile
                _weight_spec((C_pad, H_pad), lambda i: (0, 0), single_buffer_weights),   # w1 (resident)
                _weight_spec((1, H_pad), lambda i: (0, 0), single_buffer_weights),       # b1
                _weight_spec((H_pad, C_pad), lambda i: (0, 0), single_buffer_weights),   # w2 (resident)
                _weight_spec((1, C_pad), lambda i: (0, 0), single_buffer_weights),       # b2
            ],
            out_specs=pl.BlockSpec((TM, C_pad), lambda i: (i, 0)),
            compiler_params=pltpu.CompilerParams(
                dimension_semantics=("parallel",),
                vmem_limit_bytes=vmem_limit),
            cost_estimate=cost,
        )(x_p, w1_p, b1_p, w2_p, b2_p)
    else:
        # Largest H tile (multiple of 128, preferring >= 256 for the 256-wide
        # v6e/v7x MXU) whose double-buffered weight slices fit the budget.
        if block_h is not None:
            TH = block_h
        else:
            TH = 128
            for cand in (2048, 1024, 512, 256):
                if H_pad % cand == 0 and 8 * C_pad * cand <= 16 * _MIB:
                    TH = cand
                    break
        assert H_pad % TH == 0, (H_pad, TH)
        n_h_tiles = H_pad // TH
        htile_bytes = (
            8 * C_pad * TH                    # w1/w2 tiles, bf16, double-buffered
            + 2 * 4 * (TH + C_pad)            # biases
            + 2 * 2 * TM * C_pad * itemsize   # x + out tiles
            + TM * C_pad * 4                  # accumulator scratch
            + TM * TH * 6)                    # hidden intermediate
        vmem_limit = int(min(max(1.5 * htile_bytes, 32 * _MIB), 64 * _MIB))
        cost = pl.CostEstimate(
            flops=flops, transcendentals=0,
            bytes_accessed=int(2 * M_pad * C_pad * itemsize
                               + weight_bytes * n_row_tiles))
        out = pl.pallas_call(
            _ffn_htiled_kernel,
            out_shape=jax.ShapeDtypeStruct((M_pad, C_pad), x.dtype),
            grid=(n_row_tiles, n_h_tiles),
            in_specs=[
                pl.BlockSpec((TM, C_pad), lambda i, h: (i, 0)),    # x row tile
                pl.BlockSpec((C_pad, TH), lambda i, h: (0, h)),    # w1 column slab
                pl.BlockSpec((1, TH), lambda i, h: (0, h)),        # b1 slab
                pl.BlockSpec((TH, C_pad), lambda i, h: (h, 0)),    # w2 row slab
                _weight_spec((1, C_pad), lambda i, h: (0, 0), single_buffer_weights),  # b2 (resident)
            ],
            out_specs=pl.BlockSpec((TM, C_pad), lambda i, h: (i, 0)),
            scratch_shapes=[pltpu.VMEM((TM, C_pad), jnp.float32)],
            compiler_params=pltpu.CompilerParams(
                dimension_semantics=("parallel", "arbitrary"),
                vmem_limit_bytes=vmem_limit),
            cost_estimate=cost,
        )(x_p, w1_p, b1_p, w2_p, b2_p)

    if (M_pad, C_pad) != (M, C):
        out = out[:M, :C]
    return out.reshape(orig_shape)


def feed_forward(x, w1_p, b1_p, w2_p, b2_p, *, block_m: int = 512,
                 block_h: Optional[int] = None, force_h_tiled: bool = False):
    """x: (..., C); padded params from prepare_ffn_params."""
    return _feed_forward_impl(
        x, w1_p, b1_p, w2_p, b2_p, block_m=block_m, block_h=block_h,
        force_h_tiled=force_h_tiled,
        single_buffer_weights=_buffered_one_supported())


# ---------------------------------------------------------------------------
def _reference_bf16(x, w1, b1, w2, b2):
    """bf16-operand / f32-accumulation reference matching the kernel numerics."""
    C = x.shape[-1]
    xb = x.reshape(-1, C).astype(jnp.bfloat16).astype(jnp.float32)
    w1b = w1.astype(jnp.bfloat16).astype(jnp.float32)
    w2b = w2.astype(jnp.bfloat16).astype(jnp.float32)
    h = jnp.maximum(xb @ w1b + b1, 0.0)
    hb = h.astype(jnp.bfloat16).astype(jnp.float32)
    return (hb @ w2b + b2).reshape(x.shape)


def _reference_f32(x, w1, b1, w2, b2):
    C = x.shape[-1]
    h = jnp.maximum(x.reshape(-1, C) @ w1 + b1, 0.0)
    return (h @ w2 + b2).reshape(x.shape)


if __name__ == "__main__":
    key = jax.random.PRNGKey(0)

    def make_case(k, B, T, C):
        H = 4 * C
        kx, kw1, kb1, kw2, kb2 = jax.random.split(k, 5)
        std = 0.02
        x = jax.random.normal(kx, (B, T, C), jnp.float32)
        # Weights stored [in, out]: kernel computes x @ W (== torch's x @ W.T
        # with W drawn from the same distribution).
        w1 = jax.random.normal(kw1, (C, H), jnp.float32) * std
        b1 = jax.random.normal(kb1, (H,), jnp.float32) * std
        w2 = jax.random.normal(kw2, (H, C), jnp.float32) * std
        b2 = jax.random.normal(kb2, (C,), jnp.float32) * std
        return x, w1, b1, w2, b2

    k1, k2 = jax.random.split(key)

    # Case 1: batch=2, seq=8, n_embd=32 -> resident-weight path.
    x, w1, b1, w2, b2 = make_case(k1, 2, 8, 32)
    params = prepare_ffn_params(w1, b1, w2, b2)
    y = feed_forward(x, *params)
    jax.block_until_ready(y)
    assert y.shape == x.shape and bool(jnp.isfinite(y).all())
    y_ref = _reference_bf16(x, w1, b1, w2, b2)
    assert jnp.allclose(y, y_ref, rtol=1e-3, atol=1e-4), \
        float(jnp.max(jnp.abs(y - y_ref)))
    y_f32 = _reference_f32(x, w1, b1, w2, b2)
    assert jnp.allclose(y, y_f32, rtol=5e-2, atol=5e-3), \
        float(jnp.max(jnp.abs(y - y_f32)))

    # Case 2: n_embd=128, force the H-tiled accumulator path (2 H steps).
    x2, w1_, b1_, w2_, b2_ = make_case(k2, 2, 8, 128)
    params2 = prepare_ffn_params(w1_, b1_, w2_, b2_)
    y2 = feed_forward(x2, *params2, force_h_tiled=True, block_h=256)
    jax.block_until_ready(y2)
    assert y2.shape == x2.shape and bool(jnp.isfinite(y2).all())
    y2_ref = _reference_bf16(x2, w1_, b1_, w2_, b2_)
    assert jnp.allclose(y2, y2_ref, rtol=1e-3, atol=1e-4), \
        float(jnp.max(jnp.abs(y2 - y2_ref)))

    print("KERNEL_OK")
</pallas_src>

<mosaic_0001>
module attributes {stable_mosaic.version = 11 : i64} {
  func.func @_copy_kernel(%arg0: i32, %arg1: memref<8x128xf32, #tpu.memory_space<vmem>>, %arg2: memref<8x128xf32, #tpu.memory_space<vmem>>) attributes {dimension_semantics = [#tpu.dimension_semantics<arbitrary>], iteration_bounds = array<i64: 2>, scalar_prefetch = 0 : i64, scratch_operands = 0 : i64, tpu.core_type = #tpu.core_type<tc>, window_params = [{pipeline_mode = #tpu.pipeline_mode<synchronous>, transform_indices = @transform_0, window_bounds = array<i64: 8, 128>}, {pipeline_mode = #tpu.pipeline_mode<synchronous>, transform_indices = @transform_1, window_bounds = array<i64: 8, 128>}]} {
    %c0 = arith.constant 0 : index
    %c0_0 = arith.constant 0 : index
    %0 = vector.load %arg1[%c0, %c0_0] : memref<8x128xf32, #tpu.memory_space<vmem>>, vector<8x128xf32>
    %c0_1 = arith.constant 0 : index
    %c0_2 = arith.constant 0 : index
    %1 = vector.load %arg2[%c0_1, %c0_2] : memref<8x128xf32, #tpu.memory_space<vmem>>, vector<8x128xf32>
    tpu.vector_store %arg2[%c0_1, %c0_2], %0 {strides = array<i32>} : memref<8x128xf32, #tpu.memory_space<vmem>>, vector<8x128xf32>,
    return
  }
  func.func @transform_0(%arg0: i32) -> (i32, i32) {
    %c0_i32 = arith.constant 0 : i32
    %c0_i32_0 = arith.constant 0 : i32
    %c0_i32_1 = arith.constant 0 : i32
    return %c0_i32, %c0_i32_0 : i32, i32
  }
  func.func @transform_1(%arg0: i32) -> (i32, i32) {
    %c0_i32 = arith.constant 0 : i32
    %c0_i32_0 = arith.constant 0 : i32
    %c0_i32_1 = arith.constant 0 : i32
    return %c0_i32, %c0_i32_0 : i32, i32
  }
}

module attributes {stable_mosaic.version = 11 : i64} {
  func.func @_ffn_resident_kernel(%arg0: i32, %arg1: memref<8x128xf32, #tpu.memory_space<vmem>>, %arg2: memref<128x128xbf16, #tpu.memory_space<vmem>>, %arg3: memref<1x128xf32, #tpu.memory_space<vmem>>, %arg4: memref<128x128xbf16, #tpu.memory_space<vmem>>, %arg5: memref<1x128xf32, #tpu.memory_space<vmem>>, %arg6: memref<8x128xf32, #tpu.memory_space<vmem>>) attributes {dimension_semantics = [#tpu.dimension_semantics<parallel>], iteration_bounds = array<i64: 2>, scalar_prefetch = 0 : i64, scratch_operands = 0 : i64, tpu.core_type = #tpu.core_type<tc>, window_params = [{transform_indices = @transform_0, window_bounds = array<i64: 8, 128>}, {pipeline_mode = #tpu.pipeline_mode<synchronous>, transform_indices = @transform_1, window_bounds = array<i64: 128, 128>}, {pipeline_mode = #tpu.pipeline_mode<synchronous>, transform_indices = @transform_2, window_bounds = array<i64: 1, 128>}, {pipeline_mode = #tpu.pipeline_mode<synchronous>, transform_indices = @transform_3, window_bounds = array<i64: 128, 128>}, {pipeline_mode = #tpu.pipeline_mode<synchronous>, transform_indices = @transform_4, window_bounds = array<i64: 1, 128>}, {transform_indices = @transform_5, window_bounds = array<i64: 8, 128>}]} {
    %c0 = arith.constant 0 : index
    %c0_0 = arith.constant 0 : index
    %0 = vector.load %arg1[%c0, %c0_0] : memref<8x128xf32, #tpu.memory_space<vmem>>, vector<8x128xf32>
    %1 = arith.truncf %0 : vector<8x128xf32> to vector<8x128xbf16>
    %c0_1 = arith.constant 0 : index
    %c0_2 = arith.constant 0 : index
    %2 = vector.load %arg2[%c0_1, %c0_2] : memref<128x128xbf16, #tpu.memory_space<vmem>>, vector<128x128xbf16>
    %cst = arith.constant dense<0.000000e+00> : vector<8x128xf32>
    %3 = tpu.matmul %1, %2, %cst {dimension_numbers = #tpu.dot_dimension_numbers<[1], [0], [0], [1], [0, 0, 1, 1], [], []>} : vector<8x128xbf16>, vector<128x128xbf16>, vector<8x128xf32> -> vector<8x128xf32>
    %c0_3 = arith.constant 0 : index
    %c0_4 = arith.constant 0 : index
    %4 = vector.load %arg3[%c0_3, %c0_4] : memref<1x128xf32, #tpu.memory_space<vmem>>, vector<1x128xf32>
    %5 = vector.broadcast %4 : vector<1x128xf32> to vector<8x128xf32>
    %6 = arith.addf %3, %5 : vector<8x128xf32>
    %cst_5 = arith.constant 0.000000e+00 : f32
    %7 = vector.broadcast %cst_5 : f32 to vector<8x128xf32>
    %8 = arith.maximumf %6, %7 : vector<8x128xf32>
    %9 = arith.truncf %8 : vector<8x128xf32> to vector<8x128xbf16>
    %c0_6 = arith.constant 0 : index
    %c0_7 = arith.constant 0 : index
    %10 = vector.load %arg4[%c0_6, %c0_7] : memref<128x128xbf16, #tpu.memory_space<vmem>>, vector<128x128xbf16>
    %cst_8 = arith.constant dense<0.000000e+00> : vector<8x128xf32>
    %11 = tpu.matmul %9, %10, %cst_8 {dimension_numbers = #tpu.dot_dimension_numbers<[1], [0], [0], [1], [0, 0, 1, 1], [], []>} : vector<8x128xbf16>, vector<128x128xbf16>, vector<8x128xf32> -> vector<8x128xf32>
    %c0_9 = arith.constant 0 : index
    %c0_10 = arith.constant 0 : index
    %12 = vector.load %arg5[%c0_9, %c0_10] : memref<1x128xf32, #tpu.memory_space<vmem>>, vector<1x128xf32>
    %13 = vector.broadcast %12 : vector<1x128xf32> to vector<8x128xf32>
    %14 = arith.addf %11, %13 : vector<8x128xf32>
    %c0_11 = arith.constant 0 : index
    %c0_12 = arith.constant 0 : index
    %15 = vector.load %arg6[%c0_11, %c0_12] : memref<8x128xf32, #tpu.memory_space<vmem>>, vector<8x128xf32>
    tpu.vector_store %arg6[%c0_11, %c0_12], %14 {strides = array<i32>} : memref<8x128xf32, #tpu.memory_space<vmem>>, vector<8x128xf32>,
    return
  }
  func.func @transform_0(%arg0: i32) -> (i32, i32) {
    %c0_i32 = arith.constant 0 : i32
    %c0_i32_0 = arith.constant 0 : i32
    return %arg0, %c0_i32 : i32, i32
  }
  func.func @transform_1(%arg0: i32) -> (i32, i32) {
    %c0_i32 = arith.constant 0 : i32
    %c0_i32_0 = arith.constant 0 : i32
    %c0_i32_1 = arith.constant 0 : i32
    return %c0_i32, %c0_i32_0 : i32, i32
  }
  func.func @transform_2(%arg0: i32) -> (i32, i32) {
    %c0_i32 = arith.constant 0 : i32
    %c0_i32_0 = arith.constant 0 : i32
    %c0_i32_1 = arith.constant 0 : i32
    return %c0_i32, %c0_i32_0 : i32, i32
  }
  func.func @transform_3(%arg0: i32) -> (i32, i32) {
    %c0_i32 = arith.constant 0 : i32
    %c0_i32_0 = arith.constant 0 : i32
    %c0_i32_1 = arith.constant 0 : i32
    return %c0_i32, %c0_i32_0 : i32, i32
  }
  func.func @transform_4(%arg0: i32) -> (i32, i32) {
    %c0_i32 = arith.constant 0 : i32
    %c0_i32_0 = arith.constant 0 : i32
    %c0_i32_1 = arith.constant 0 : i32
    return %c0_i32, %c0_i32_0 : i32, i32
  }
  func.func @transform_5(%arg0: i32) -> (i32, i32) {
    %c0_i32 = arith.constant 0 : i32
    %c0_i32_0 = arith.constant 0 : i32
    return %arg0, %c0_i32 : i32, i32
  }
}

</mosaic_0001>

<llo_original>
// kernel: tpu_custom_call.1
$region0: #{tpu_custom_call.1}
  #allocation0 [shape = 'u32[]', space=smem, size = 0x4, offset = 0x4, fixed_abs, tag = 'smem constant byte address 0x4 - core index']
  #allocation1 [shape = 'u32[144,128]{1,0:T(1,128)}', space=vmem, size = 0x12000, scoped, tag = 'internal scratch']
  %s0 = inlined_call_operand.hbm [shape: f32[8,128], index: 0, kind: input, shape index: {}]
  %s1 = inlined_call_operand.hbm [shape: f32[8,128], index: 1, kind: output, shape index: {}]
  %s2 = sld [smem:[#allocation0]]
  $region41: #{tpu_custom_call.1} parent=0
    _
  %s4 = ssub.s32 1, %s2
  %s5 = scalar_select 0, %s4, %s2
  $region1: #{tpu_custom_call.1} parent=0
    #allocation2 [shape = 'u8[4096]{0}', space=vmem, size = 0x1000, scoped, tag = 'input window, operand 0, single buffered']
    #allocation3 [shape = 's32[2]{0}', space=sflag, size = 0x8, scoped, tag = 'scoped memory for tpu_custom_call.1']
    #allocation4 [shape = 's32[2]{0}', space=sflag, size = 0x8, scoped, tag = 'scoped memory for tpu_custom_call.1']
    #allocation5 [shape = 'u8[4096]{0}', space=vmem, size = 0x1000, scoped, tag = 'output window, operand 0, single buffered']
    %6 = vsyncpa [#allocation3], 0
    %7 = vsyncpa [#allocation4], 0
    loop: start=0, step=1, limit=4
    $region2: #{tpu_custom_call.1} parent=1 // loop_pre_header
      _
    $region3: #{tpu_custom_call.1} parent=1 // loop_header
      %s9 = sphi 0, %s13
      %p10 = scmp.ge.s32.totalorder %s9, 4
      %s17 = sphi 0, %s17
      %s19 = sphi 0, %s17
      %s20 = sphi 0, %s19
      %s34 = sphi 0, %s20
      %s38 = sphi 0, %s38
      %s40 = sphi 0, %s38
      %s41 = sphi 0, %s40
      %s55 = sphi 0, %s41
    $region4: #{tpu_custom_call.1} parent=1 // loop_header_branch
      %12 = sbr.rel (%p10) target = $region8
    $region5: #{tpu_custom_call.1} parent=1 // loop_body
      %s14 = ssub.s32 %s9, 1
      %s15 = ssub.s32 %s9, 2
      %s16 = sadd.s32 %s9, 1
      %s18 = sadd.s32 %s17, 1
      %p21 = scmp.eq.s32.totalorder %s9, 1
      %p22 = scmp.ne.s32.totalorder %s17, %s19
      %p23 = scmp.eq.s32.totalorder %s9, 0
      %p24 = por %p22, %p23
      %p25 = scmp.ne.s32.totalorder %s17, %s19
      %p26 = scmp.eq.s32.totalorder %s14, 1
      %p27 = por %p25, %p26
      %p28 = scmp.ne.s32.totalorder %s19, %s20
      %p29 = scmp.eq.s32.totalorder %s14, 0
      %p30 = por %p28, %p29
      %p31 = scmp.ne.s32.totalorder %s19, %s20
      %p32 = scmp.eq.s32.totalorder %s15, 1
      %p33 = por %p31, %p32
      %p35 = scmp.ne.s32.totalorder %s20, %s34
      %p36 = scmp.eq.s32.totalorder %s15, 0
      %p37 = por %p35, %p36
      %s39 = sadd.s32 %s38, 1
      %p42 = scmp.eq.s32.totalorder %s9, 1
      %p43 = scmp.ne.s32.totalorder %s38, %s40
      %p44 = scmp.eq.s32.totalorder %s9, 0
      %p45 = por %p43, %p44
      %p46 = scmp.ne.s32.totalorder %s38, %s40
      %p47 = scmp.eq.s32.totalorder %s14, 1
      %p48 = por %p46, %p47
      %p49 = scmp.ne.s32.totalorder %s40, %s41
      %p50 = scmp.eq.s32.totalorder %s14, 0
      %p51 = por %p49, %p50
      %p52 = scmp.ne.s32.totalorder %s40, %s41
      %p53 = scmp.eq.s32.totalorder %s15, 1
      %p54 = por %p52, %p53
      %p56 = scmp.ne.s32.totalorder %s41, %s55
      %p57 = scmp.eq.s32.totalorder %s15, 0
      %p58 = por %p56, %p57
      %p59 = scmp.le.s32.totalorder 1, %s9
      %p60 = scmp.lt.s32.totalorder %s9, 3
      %p61 = pnand %p59, %p60
      %p62 = pneg %p61
      // Predicated region
      $region9: #{tpu_custom_call.1} parent=5 // pred_check
        _
      $region10: #{tpu_custom_call.1} parent=5 // pred_check_branch
        %64 = sbr.rel (%p61) target = $region12
      $region11: #{tpu_custom_call.1} parent=5 // pred_region
        %s65 = ssub.s32 %s9, 1
        // Predicated region
        $region13: #{tpu_custom_call.1} parent=11 // pred_check
          %p66 = pneg %p30
        $region14: #{tpu_custom_call.1} parent=11 // pred_check_branch
          %68 = sbr.rel (%p66) target = $region16
        $region15: #{tpu_custom_call.1} parent=11 // pred_region
          %s70 = ssub.s32 128, 128
          %71 = vsyncadd [#allocation3], %s70
          %s73 = sshll.u32 [#allocation2], 4
          %s74 = int_to_ptr.vmem [resolvable:$true] %s73
          %76 = dma.hbm_to_vmem [thread:$0]  %s0, 128, %s74, [#allocation3]
        $region16: #{tpu_custom_call.1} parent=11 // pred_fallthru
          _
      $region12: #{tpu_custom_call.1} parent=5 // pred_fallthru
        _
      %p77 = scmp.lt.s32.totalorder %s9, 2
      // Predicated region
      $region17: #{tpu_custom_call.1} parent=5 // pred_check
        %p78 = pneg %p77
      $region18: #{tpu_custom_call.1} parent=5 // pred_check_branch
        %80 = sbr.rel (%p78) target = $region20
      $region19: #{tpu_custom_call.1} parent=5 // pred_region
        _
      $region20: #{tpu_custom_call.1} parent=5 // pred_fallthru
        _
      %p81 = scmp.le.s32.totalorder 1, %s9
      %p82 = scmp.lt.s32.totalorder %s9, 3
      %p83 = pnand %p81, %p82
      %p84 = pneg %p83
      // Predicated region
      $region21: #{tpu_custom_call.1} parent=5 // pred_check
        _
      $region22: #{tpu_custom_call.1} parent=5 // pred_check_branch
        %86 = sbr.rel (%p83) target = $region24
      $region23: #{tpu_custom_call.1} parent=5 // pred_region
        %s87 = ssub.s32 %s9, 1
        // Predicated region
        $region25: #{tpu_custom_call.1} parent=23 // pred_check
          %p88 = pneg %p30
        $region26: #{tpu_custom_call.1} parent=23 // pred_check_branch
          %90 = sbr.rel (%p88) target = $region28
        $region27: #{tpu_custom_call.1} parent=23 // pred_region
          %91 = dma.done [#allocation3], 128
        $region28: #{tpu_custom_call.1} parent=23 // pred_fallthru
          _
        %p92 = pneg %p30
        %p93 = pneg %p27
        %p94 = pneg %p51
        %p95 = pneg %p48
        %v96 = vld [vmem:[#allocation2] sm:$0xff]
        %97 = vst [vmem:[#allocation5] sm:$0xff] %v96
        // Predicated region
        $region29: #{tpu_custom_call.1} parent=23 // pred_check
          %p98 = pneg %p48
        $region30: #{tpu_custom_call.1} parent=23 // pred_check_branch
          %100 = sbr.rel (%p98) target = $region32
        $region31: #{tpu_custom_call.1} parent=23 // pred_region
          %s102 = ssub.s32 128, 128
          %103 = vsyncadd [#allocation4], %s102
          %s105 = sshll.u32 [#allocation5], 4
          %s106 = int_to_ptr.vmem [resolvable:$true] %s105
          %108 = dma.vmem_to_hbm [thread:$0]  %s106, 128, %s1, [#allocation4]
        $region32: #{tpu_custom_call.1} parent=23 // pred_fallthru
          _
        // Predicated region
        $region33: #{tpu_custom_call.1} parent=23 // pred_check
          %p109 = pneg %p48
        $region34: #{tpu_custom_call.1} parent=23 // pred_check_branch
          %111 = sbr.rel (%p109) target = $region36
        $region35: #{tpu_custom_call.1} parent=23 // pred_region
          %112 = dma.done [#allocation4], 128
        $region36: #{tpu_custom_call.1} parent=23 // pred_fallthru
          _
      $region24: #{tpu_custom_call.1} parent=5 // pred_fallthru
        _
      %p113 = scmp.le.s32.totalorder 2, %s9
      // Predicated region
      $region37: #{tpu_custom_call.1} parent=5 // pred_check
        %p114 = pneg %p113
      $region38: #{tpu_custom_call.1} parent=5 // pred_check_branch
        %116 = sbr.rel (%p114) target = $region40
      $region39: #{tpu_custom_call.1} parent=5 // pred_region
        %s117 = ssub.s32 %s9, 2
      $region40: #{tpu_custom_call.1} parent=5 // pred_fallthru
        _
    $region6: #{tpu_custom_call.1} parent=1 // loop_footer
      %s13 = sadd.s32 1, %s9
    $region7: #{tpu_custom_call.1} parent=1 // loop_footer_branch
      %8 = sbr.rel target = $region3
    $region8: #{tpu_custom_call.1} parent=1 // loop_exit
      _
    %118 = vsyncpa [#allocation3], 1
    %s119 = scalar_lea.sflag [#allocation3], 1
    %120 = vsyncpa %s119, 1
    %121 = vsyncpa [#allocation4], 1
    %s122 = scalar_lea.sflag [#allocation4], 1
    %123 = vsyncpa %s122, 1

// kernel: _feed_forward_impl.1
$region0: #{_feed_forward_impl.1}
  #allocation0 [shape = 'u32[]', space=smem, size = 0x4, offset = 0x4, fixed_abs, tag = 'smem constant byte address 0x4 - core index']
  #allocation1 [shape = 'u32[144,128]{1,0:T(1,128)}', space=vmem, size = 0x12000, scoped, tag = 'internal scratch']
  %s0 = inlined_call_operand.vmem [shape: f32[16,128], index: 0, kind: input, shape index: {}]
  %s1 = inlined_call_operand.hbm [shape: bf16[128,128], index: 1, kind: input, shape index: {}]
  %s2 = inlined_call_operand.vmem [shape: f32[1,128], index: 2, kind: input, shape index: {}]
  %s3 = inlined_call_operand.hbm [shape: bf16[128,128], index: 3, kind: input, shape index: {}]
  %s4 = inlined_call_operand.vmem [shape: f32[1,128], index: 4, kind: input, shape index: {}]
  %s5 = inlined_call_operand.vmem [shape: f32[16,128], index: 5, kind: output, shape index: {}]
  %s6 = sld [smem:[#allocation0]]
  $region61: #{_feed_forward_impl.1} parent=0
    _
  %s8 = ssub.s32 1, %s6
  %s9 = scalar_select 0, %s8, %s6
  $region1: #{_feed_forward_impl.1} parent=0
    #allocation2 [shape = 'u8[32768]{0}', space=vmem, size = 0x8000, scoped, tag = 'input window, operand 1, single buffered']
    #allocation3 [shape = 's32[2]{0}', space=sflag, size = 0x8, scoped, tag = 'scoped memory for _feed_forward_impl.1']
    #allocation4 [shape = 'u8[32768]{0}', space=vmem, size = 0x8000, scoped, tag = 'input window, operand 3, single buffered']
    #allocation5 [shape = 's32[1]{0}', space=sflag, size = 0x4, scoped, tag = 'scoped memory for _feed_forward_impl.1']
    %10 = vsyncpa [#allocation3], 0
    %11 = vsyncpa [#allocation5], 0
    loop: start=0, step=1, limit=4
    $region2: #{_feed_forward_impl.1} parent=1 // loop_pre_header
      _
    $region3: #{_feed_forward_impl.1} parent=1 // loop_header
      %s13 = sphi 0, %s17
      %p14 = scmp.ge.s32.totalorder %s13, 4
      %s23 = sphi 0, %s25
      %s26 = sphi 0, %s23
      %s27 = sphi 0, %s26
      %s43 = sphi 0, %s27
      %s47 = sphi 0, %s47
      %s49 = sphi 0, %s47
      %s50 = sphi 0, %s49
      %s64 = sphi 0, %s50
      %s68 = sphi 0, %s68
      %s70 = sphi 0, %s68
      %s71 = sphi 0, %s70
      %s85 = sphi 0, %s71
      %s89 = sphi 0, %s89
      %s91 = sphi 0, %s89
      %s92 = sphi 0, %s91
      %s106 = sphi 0, %s92
      %s110 = sphi 0, %s110
      %s112 = sphi 0, %s110
      %s113 = sphi 0, %s112
      %s127 = sphi 0, %s113
      %s133 = sphi 0, %s135
      %s136 = sphi 0, %s133
      %s137 = sphi 0, %s136
      %s153 = sphi 0, %s137
    $region4: #{_feed_forward_impl.1} parent=1 // loop_header_branch
      %16 = sbr.rel (%p14) target = $region8
    $region5: #{_feed_forward_impl.1} parent=1 // loop_body
      %s18 = ssub.s32 %s13, 1
      %s19 = ssub.s32 %s13, 2
      %s20 = sadd.s32 %s13, 1
      %s21 = ssub.s32 %s13, %s20
      %p22 = scmp.eq.s32.totalorder %s21, 0
      %s24 = sadd.s32 %s23, 1
      %s25 = scalar_select %p22, %s23, %s24
      %p28 = pneg %p22
      %p29 = scmp.eq.s32.totalorder %s13, 1
      %p30 = por %p28, %p29
      %p31 = scmp.ne.s32.totalorder %s23, %s26
      %p32 = scmp.eq.s32.totalorder %s13, 0
      %p33 = por %p31, %p32
      %p34 = scmp.ne.s32.totalorder %s23, %s26
      %p35 = scmp.eq.s32.totalorder %s18, 1
      %p36 = por %p34, %p35
      %p37 = scmp.ne.s32.totalorder %s26, %s27
      %p38 = scmp.eq.s32.totalorder %s18, 0
      %p39 = por %p37, %p38
      %p40 = scmp.ne.s32.totalorder %s26, %s27
      %p41 = scmp.eq.s32.totalorder %s19, 1
      %p42 = por %p40, %p41
      %p44 = scmp.ne.s32.totalorder %s27, %s43
      %p45 = scmp.eq.s32.totalorder %s19, 0
      %p46 = por %p44, %p45
      %s48 = sadd.s32 %s47, 1
      %p51 = scmp.eq.s32.totalorder %s13, 1
      %p52 = scmp.ne.s32.totalorder %s47, %s49
      %p53 = scmp.eq.s32.totalorder %s13, 0
      %p54 = por %p52, %p53
      %p55 = scmp.ne.s32.totalorder %s47, %s49
      %p56 = scmp.eq.s32.totalorder %s18, 1
      %p57 = por %p55, %p56
      %p58 = scmp.ne.s32.totalorder %s49, %s50
      %p59 = scmp.eq.s32.totalorder %s18, 0
      %p60 = por %p58, %p59
      %p61 = scmp.ne.s32.totalorder %s49, %s50
      %p62 = scmp.eq.s32.totalorder %s19, 1
      %p63 = por %p61, %p62
      %p65 = scmp.ne.s32.totalorder %s50, %s64
      %p66 = scmp.eq.s32.totalorder %s19, 0
      %p67 = por %p65, %p66
      %s69 = sadd.s32 %s68, 1
      %p72 = scmp.eq.s32.totalorder %s13, 1
      %p73 = scmp.ne.s32.totalorder %s68, %s70
      %p74 = scmp.eq.s32.totalorder %s13, 0
      %p75 = por %p73, %p74
      %p76 = scmp.ne.s32.totalorder %s68, %s70
      %p77 = scmp.eq.s32.totalorder %s18, 1
      %p78 = por %p76, %p77
      %p79 = scmp.ne.s32.totalorder %s70, %s71
      %p80 = scmp.eq.s32.totalorder %s18, 0
      %p81 = por %p79, %p80
      %p82 = scmp.ne.s32.totalorder %s70, %s71
      %p83 = scmp.eq.s32.totalorder %s19, 1
      %p84 = por %p82, %p83
      %p86 = scmp.ne.s32.totalorder %s71, %s85
      %p87 = scmp.eq.s32.totalorder %s19, 0
      %p88 = por %p86, %p87
      %s90 = sadd.s32 %s89, 1
      %p93 = scmp.eq.s32.totalorder %s13, 1
      %p94 = scmp.ne.s32.totalorder %s89, %s91
      %p95 = scmp.eq.s32.totalorder %s13, 0
      %p96 = por %p94, %p95
      %p97 = scmp.ne.s32.totalorder %s89, %s91
      %p98 = scmp.eq.s32.totalorder %s18, 1
      %p99 = por %p97, %p98
      %p100 = scmp.ne.s32.totalorder %s91, %s92
      %p101 = scmp.eq.s32.totalorder %s18, 0
      %p102 = por %p100, %p101
      %p103 = scmp.ne.s32.totalorder %s91, %s92
      %p104 = scmp.eq.s32.totalorder %s19, 1
      %p105 = por %p103, %p104
      %p107 = scmp.ne.s32.totalorder %s92, %s106
      %p108 = scmp.eq.s32.totalorder %s19, 0
      %p109 = por %p107, %p108
      %s111 = sadd.s32 %s110, 1
      %p114 = scmp.eq.s32.totalorder %s13, 1
      %p115 = scmp.ne.s32.totalorder %s110, %s112
      %p116 = scmp.eq.s32.totalorder %s13, 0
      %p117 = por %p115, %p116
      %p118 = scmp.ne.s32.totalorder %s110, %s112
      %p119 = scmp.eq.s32.totalorder %s18, 1
      %p120 = por %p118, %p119
      %p121 = scmp.ne.s32.totalorder %s112, %s113
      %p122 = scmp.eq.s32.totalorder %s18, 0
      %p123 = por %p121, %p122
      %p124 = scmp.ne.s32.totalorder %s112, %s113
      %p125 = scmp.eq.s32.totalorder %s19, 1
      %p126 = por %p124, %p125
      %p128 = scmp.ne.s32.totalorder %s113, %s127
      %p129 = scmp.eq.s32.totalorder %s19, 0
      %p130 = por %p128, %p129
      %s131 = ssub.s32 %s13, %s20
      %p132 = scmp.eq.s32.totalorder %s131, 0
      %s134 = sadd.s32 %s133, 1
      %s135 = scalar_select %p132, %s133, %s134
      %p138 = pneg %p132
      %p139 = scmp.eq.s32.totalorder %s13, 1
      %p140 = por %p138, %p139
      %p141 = scmp.ne.s32.totalorder %s133, %s136
      %p142 = scmp.eq.s32.totalorder %s13, 0
      %p143 = por %p141, %p142
      %p144 = scmp.ne.s32.totalorder %s133, %s136
      %p145 = scmp.eq.s32.totalorder %s18, 1
      %p146 = por %p144, %p145
      %p147 = scmp.ne.s32.totalorder %s136, %s137
      %p148 = scmp.eq.s32.totalorder %s18, 0
      %p149 = por %p147, %p148
      %p150 = scmp.ne.s32.totalorder %s136, %s137
      %p151 = scmp.eq.s32.totalorder %s19, 1
      %p152 = por %p150, %p151
      %p154 = scmp.ne.s32.totalorder %s137, %s153
      %p155 = scmp.eq.s32.totalorder %s19, 0
      %p156 = por %p154, %p155
      %p157 = scmp.le.s32.totalorder 1, %s13
      %p158 = scmp.lt.s32.totalorder %s13, 3
      %p159 = pnand %p157, %p158
      %p160 = pneg %p159
      // Predicated region
      $region9: #{_feed_forward_impl.1} parent=5 // pred_check
        _
      $region10: #{_feed_forward_impl.1} parent=5 // pred_check_branch
        %162 = sbr.rel (%p159) target = $region12
      $region11: #{_feed_forward_impl.1} parent=5 // pred_region
        %s163 = ssub.s32 %s13, 1
        // Predicated region
        $region13: #{_feed_forward_impl.1} parent=11 // pred_check
          %p164 = pneg %p60
        $region14: #{_feed_forward_impl.1} parent=11 // pred_check_branch
          %166 = sbr.rel (%p164) target = $region16
        $region15: #{_feed_forward_impl.1} parent=11 // pred_region
          %s168 = ssub.s32 1024, 1024
          %169 = vsyncadd [#allocation3], %s168
          %s170 = sshll.u32 [#allocation2], 4
          %s171 = int_to_ptr.vmem [resolvable:$true] %s170
          %176 = dma.hbm_to_vmem [thread:$0]  %s1, 1024, %s171, [#allocation3], 64, 64, 4
        $region16: #{_feed_forward_impl.1} parent=11 // pred_fallthru
          _
        // Predicated region
        $region17: #{_feed_forward_impl.1} parent=11 // pred_check
          %p177 = pneg %p81
        $region18: #{_feed_forward_impl.1} parent=11 // pred_check_branch
          %179 = sbr.rel (%p177) target = $region20
        $region19: #{_feed_forward_impl.1} parent=11 // pred_region
          _
        $region20: #{_feed_forward_impl.1} parent=11 // pred_fallthru
          _
        // Predicated region
        $region21: #{_feed_forward_impl.1} parent=11 // pred_check
          %p180 = pneg %p102
        $region22: #{_feed_forward_impl.1} parent=11 // pred_check_branch
          %182 = sbr.rel (%p180) target = $region24
        $region23: #{_feed_forward_impl.1} parent=11 // pred_region
          %s184 = ssub.s32 1024, 1024
          %185 = vsyncadd [#allocation5], %s184
          %s186 = sshll.u32 [#allocation4], 4
          %s187 = int_to_ptr.vmem [resolvable:$true] %s186
          %192 = dma.hbm_to_vmem [thread:$0]  %s3, 1024, %s187, [#allocation5], 64, 64, 4
        $region24: #{_feed_forward_impl.1} parent=11 // pred_fallthru
          _
        // Predicated region
        $region25: #{_feed_forward_impl.1} parent=11 // pred_check
          %p193 = pneg %p123
        $region26: #{_feed_forward_impl.1} parent=11 // pred_check_branch
          %195 = sbr.rel (%p193) target = $region28
        $region27: #{_feed_forward_impl.1} parent=11 // pred_region
          _
        $region28: #{_feed_forward_impl.1} parent=11 // pred_fallthru
          _
      $region12: #{_feed_forward_impl.1} parent=5 // pred_fallthru
        _
      %p196 = scmp.lt.s32.totalorder %s13, 2
      // Predicated region
      $region29: #{_feed_forward_impl.1} parent=5 // pred_check
        %p197 = pneg %p196
      $region30: #{_feed_forward_impl.1} parent=5 // pred_check_branch
        %199 = sbr.rel (%p197) target = $region32
      $region31: #{_feed_forward_impl.1} parent=5 // pred_region
        // Predicated region
        $region33: #{_feed_forward_impl.1} parent=31 // pred_check
          %p200 = pneg %p33
        $region34: #{_feed_forward_impl.1} parent=31 // pred_check_branch
          %202 = sbr.rel (%p200) target = $region36
        $region35: #{_feed_forward_impl.1} parent=31 // pred_region
          %p203 = scmp.lt.s32.totalorder %s13, 1
          %s204 = scalar_select %p203, %s13, 1
          %s205 = smul.addr %s204, 8
          %s206 = scalar_lea.vmem %s0, %s205
        $region36: #{_feed_forward_impl.1} parent=31 // pred_fallthru
          _
      $region32: #{_feed_forward_impl.1} parent=5 // pred_fallthru
        _
      %p207 = scmp.le.s32.totalorder 1, %s13
      %p208 = scmp.lt.s32.totalorder %s13, 3
      %p209 = pnand %p207, %p208
      %p210 = pneg %p209
      // Predicated region
      $region37: #{_feed_forward_impl.1} parent=5 // pred_check
        _
      $region38: #{_feed_forward_impl.1} parent=5 // pred_check_branch
        %212 = sbr.rel (%p209) target = $region40
      $region39: #{_feed_forward_impl.1} parent=5 // pred_region
        %s213 = ssub.s32 %s13, 1
        // Predicated region
        $region41: #{_feed_forward_impl.1} parent=39 // pred_check
          %p214 = pneg %p60
        $region42: #{_feed_forward_impl.1} parent=39 // pred_check_branch
          %216 = sbr.rel (%p214) target = $region44
        $region43: #{_feed_forward_impl.1} parent=39 // pred_region
          %217 = dma.done [#allocation3], 1024
        $region44: #{_feed_forward_impl.1} parent=39 // pred_fallthru
          _
        // Predicated region
        $region45: #{_feed_forward_impl.1} parent=39 // pred_check
          %p218 = pneg %p102
        $region46: #{_feed_forward_impl.1} parent=39 // pred_check_branch
          %220 = sbr.rel (%p218) target = $region48
        $region47: #{_feed_forward_impl.1} parent=39 // pred_region
          %221 = dma.done [#allocation5], 1024
        $region48: #{_feed_forward_impl.1} parent=39 // pred_fallthru
          _
        %p222 = scmp.lt.s32.totalorder %s18, 1
        %s223 = scalar_select %p222, %s18, 1
        %s224 = smul.addr %s223, 8
        %s225 = scalar_lea.vmem %s0, %s224
        %p226 = pneg %p39
        %p227 = pneg %p36
        %p228 = pneg %p60
        %p229 = pneg %p57
        %p230 = pneg %p81
        %p231 = pneg %p78
        %p232 = pneg %p102
        %p233 = pneg %p99
        %p234 = pneg %p123
        %p235 = pneg %p120
        %p236 = pneg %p149
        %p237 = pneg %p146
        %p238 = scmp.lt.s32.totalorder %s18, 1
        %s239 = scalar_select %p238, %s18, 1
        %s240 = smul.addr %s239, 8
        %s241 = scalar_lea.vmem %s5, %s240
        %p242 = scmp.lt.s32.totalorder %s18, 1
        %s243 = scalar_select %p242, %s18, 1
        %s244 = smul.addr %s243, 8
        %s245 = scalar_lea.vmem %s0, %s244
        %p246 = scmp.lt.s32.totalorder %s18, 1
        %s247 = scalar_select %p246, %s18, 1
        %s248 = smul.addr %s247, 8
        %s249 = scalar_lea.vmem %s5, %s248
        %v251 = vld [vmem:[%s245] sm:$0xff]
        %v252 = vpack.c.bf16 %v251, %v251
        %v253 = vld [vmem:[#allocation2] sm:$0xf]
        %v254 = vld [vmem:[#allocation2 + $0x4] sm:$0xf]
        %v255 = vld [vmem:[#allocation2 + $0x8] sm:$0xf]
        %v256 = vld [vmem:[#allocation2 + $0xc] sm:$0xf]
        %v257 = vld [vmem:[#allocation2 + $0x10] sm:$0xf]
        %v258 = vld [vmem:[#allocation2 + $0x14] sm:$0xf]
        %v259 = vld [vmem:[#allocation2 + $0x18] sm:$0xf]
        %v260 = vld [vmem:[#allocation2 + $0x1c] sm:$0xf]
        %v261 = vld [vmem:[#allocation2 + $0x20] sm:$0xf]
        %v262 = vld [vmem:[#allocation2 + $0x24] sm:$0xf]
        %v263 = vld [vmem:[#allocation2 + $0x28] sm:$0xf]
        %v264 = vld [vmem:[#allocation2 + $0x2c] sm:$0xf]
        %v265 = vld [vmem:[#allocation2 + $0x30] sm:$0xf]
        %v266 = vld [vmem:[#allocation2 + $0x34] sm:$0xf]
        %v267 = vld [vmem:[#allocation2 + $0x38] sm:$0xf]
        %v268 = vld [vmem:[#allocation2 + $0x3c] sm:$0xf]
        %v269 = vld [vmem:[%s2] sm:$0x1]
        %v271 = vlaneseq
        %v272 = vshrl.u32 %v271, 7
        %v273 = vsub.s32 0, %v272
        %v274 = vrot.slane %v269, %v273
        %v292 = vunpack.c.l.b16 %v253
        %v293 = vunpack.c.l.b16 %v254
        %v294 = vunpack.c.l.b16 %v255
        %v295 = vunpack.c.l.b16 %v256
        %v296 = vunpack.c.l.b16 %v257
        %v297 = vunpack.c.l.b16 %v258
        %v298 = vunpack.c.l.b16 %v259
        %v299 = vunpack.c.l.b16 %v260
        %v300 = vunpack.c.l.b16 %v261
        %v301 = vunpack.c.l.b16 %v262
        %v302 = vunpack.c.l.b16 %v263
        %v303 = vunpack.c.l.b16 %v264
        %v304 = vunpack.c.l.b16 %v265
        %v305 = vunpack.c.l.b16 %v266
        %v306 = vunpack.c.l.b16 %v267
        %v307 = vunpack.c.l.b16 %v268
        %v308 = vpack.c.b16 %v293, %v292
        %v309 = vpack.c.b16 %v295, %v294
        %v310 = vpack.c.b16 %v297, %v296
        %v311 = vpack.c.b16 %v299, %v298
        %v312 = vpack.c.b16 %v301, %v300
        %v313 = vpack.c.b16 %v303, %v302
        %v314 = vpack.c.b16 %v305, %v304
        %v315 = vpack.c.b16 %v307, %v306
        %324 = vmatprep.subr.bf16.mxu0 0
        %325 = vmatpush1.bf16.msra.mxu0 %v315
        %326 = vmatprep.subr.bf16.mxu0 0
        %327 = vmatpush1.bf16.msra.mxu0 %v314
        %328 = vmatprep.subr.bf16.mxu0 0
        %329 = vmatpush1.bf16.msra.mxu0 %v313
        %330 = vmatprep.subr.bf16.mxu0 0
        %331 = vmatpush1.bf16.msra.mxu0 %v312
        %332 = vmatprep.subr.bf16.mxu0 0
        %333 = vmatpush1.bf16.msra.mxu0 %v311
        %334 = vmatprep.subr.bf16.mxu0 0
        %335 = vmatpush1.bf16.msra.mxu0 %v310
        %336 = vmatprep.subr.bf16.mxu0 0
        %337 = vmatpush1.bf16.msra.mxu0 %v309
        %338 = vmatprep.subr.bf16.mxu0 0
        %339 = vmatpush1.bf16.msra.mxu0 %v308
        %340 = vmatprep.subr.bf16.mxu0 0
        %341 = vmatpush2.bf16.msra.mxu0 0
        %342 = vmatprep.subr.bf16.mxu0 0
        %343 = vmatpush2.bf16.msra.mxu0 0
        %344 = vmatprep.subr.bf16.mxu0 0
        %345 = vmatpush2.bf16.msra.mxu0 0
        %346 = vmatprep.subr.bf16.mxu0 0
        %347 = vmatpush2.bf16.msra.mxu0 0
        %348 = vmatprep.subr.bf16.mxu0 0
        %349 = vmatpush2.bf16.msra.mxu0 0
        %350 = vmatprep.subr.bf16.mxu0 0
        %351 = vmatpush2.bf16.msra.mxu0 0
        %352 = vmatprep.subr.bf16.mxu0 0
        %353 = vmatpush2.bf16.msra.mxu0 0
        %354 = vmatprep.subr.bf16.mxu0 0
        %355 = vmatpush2.bf16.msra.mxu0 0
        %356 = vmatprep.mubr.bf16.mxu0 0
        %357 = vmatmul.mubr.bf16.gmra.mxu0 %v252
        %v358 = vpop.f32.mrf.mxu0
        %v359 = vadd.f32 %v274, %v358
        %v360 = vpop.f32.mrf.mxu0
        %v361 = vpop.f32.mrf.mxu0
        %v362 = vpop.f32.mrf.mxu0
        %363 = vdwg.mxu0
        %v364 = vmax.f32 %v359, 0.0
        %v365 = vpack.c.bf16 %v364, %v364
        %v366 = vld [vmem:[#allocation4] sm:$0xf]
        %v367 = vld [vmem:[#allocation4 + $0x4] sm:$0xf]
        %v368 = vld [vmem:[#allocation4 + $0x8] sm:$0xf]
        %v369 = vld [vmem:[#allocation4 + $0xc] sm:$0xf]
        %v370 = vld [vmem:[#allocation4 + $0x10] sm:$0xf]
        %v371 = vld [vmem:[#allocation4 + $0x14] sm:$0xf]
        %v372 = vld [vmem:[#allocation4 + $0x18] sm:$0xf]
        %v373 = vld [vmem:[#allocation4 + $0x1c] sm:$0xf]
        %v374 = vld [vmem:[#allocation4 + $0x20] sm:$0xf]
        %v375 = vld [vmem:[#allocation4 + $0x24] sm:$0xf]
        %v376 = vld [vmem:[#allocation4 + $0x28] sm:$0xf]
        %v377 = vld [vmem:[#allocation4 + $0x2c] sm:$0xf]
        %v378 = vld [vmem:[#allocation4 + $0x30] sm:$0xf]
        %v379 = vld [vmem:[#allocation4 + $0x34] sm:$0xf]
        %v380 = vld [vmem:[#allocation4 + $0x38] sm:$0xf]
        %v381 = vld [vmem:[#allocation4 + $0x3c] sm:$0xf]
        %v382 = vld [vmem:[%s4] sm:$0x1]
        %v384 = vlaneseq
        %v385 = vshrl.u32 %v384, 7
        %v386 = vsub.s32 0, %v385
        %v387 = vrot.slane %v382, %v386
        %v405 = vunpack.c.l.b16 %v366
        %v406 = vunpack.c.l.b16 %v367
        %v407 = vunpack.c.l.b16 %v368
        %v408 = vunpack.c.l.b16 %v369
        %v409 = vunpack.c.l.b16 %v370
        %v410 = vunpack.c.l.b16 %v371
        %v411 = vunpack.c.l.b16 %v372
        %v412 = vunpack.c.l.b16 %v373
        %v413 = vunpack.c.l.b16 %v374
        %v414 = vunpack.c.l.b16 %v375
        %v415 = vunpack.c.l.b16 %v376
        %v416 = vunpack.c.l.b16 %v377
        %v417 = vunpack.c.l.b16 %v378
        %v418 = vunpack.c.l.b16 %v379
        %v419 = vunpack.c.l.b16 %v380
        %v420 = vunpack.c.l.b16 %v381
        %v421 = vpack.c.b16 %v406, %v405
        %v422 = vpack.c.b16 %v408, %v407
        %v423 = vpack.c.b16 %v410, %v409
        %v424 = vpack.c.b16 %v412, %v411
        %v425 = vpack.c.b16 %v414, %v413
        %v426 = vpack.c.b16 %v416, %v415
        %v427 = vpack.c.b16 %v418, %v417
        %v428 = vpack.c.b16 %v420, %v419
        %437 = vmatprep.subr.bf16.mxu0 0
        %438 = vmatpush1.bf16.msra.mxu0 %v428
        %439 = vmatprep.subr.bf16.mxu0 0
        %440 = vmatpush1.bf16.msra.mxu0 %v427
        %441 = vmatprep.subr.bf16.mxu0 0
        %442 = vmatpush1.bf16.msra.mxu0 %v426
        %443 = vmatprep.subr.bf16.mxu0 0
        %444 = vmatpush1.bf16.msra.mxu0 %v425
        %445 = vmatprep.subr.bf16.mxu0 0
        %446 = vmatpush1.bf16.msra.mxu0 %v424
        %447 = vmatprep.subr.bf16.mxu0 0
        %448 = vmatpush1.bf16.msra.mxu0 %v423
        %449 = vmatprep.subr.bf16.mxu0 0
        %450 = vmatpush1.bf16.msra.mxu0 %v422
        %451 = vmatprep.subr.bf16.mxu0 0
        %452 = vmatpush1.bf16.msra.mxu0 %v421
        %453 = vmatprep.subr.bf16.mxu0 0
        %454 = vmatpush2.bf16.msra.mxu0 0
        %455 = vmatprep.subr.bf16.mxu0 0
        %456 = vmatpush2.bf16.msra.mxu0 0
        %457 = vmatprep.subr.bf16.mxu0 0
        %458 = vmatpush2.bf16.msra.mxu0 0
        %459 = vmatprep.subr.bf16.mxu0 0
        %460 = vmatpush2.bf16.msra.mxu0 0
        %461 = vmatprep.subr.bf16.mxu0 0
        %462 = vmatpush2.bf16.msra.mxu0 0
        %463 = vmatprep.subr.bf16.mxu0 0
        %464 = vmatpush2.bf16.msra.mxu0 0
        %465 = vmatprep.subr.bf16.mxu0 0
        %466 = vmatpush2.bf16.msra.mxu0 0
        %467 = vmatprep.subr.bf16.mxu0 0
        %468 = vmatpush2.bf16.msra.mxu0 0
        %469 = vmatprep.mubr.bf16.mxu0 0
        %470 = vmatmul.mubr.bf16.gmra.mxu0 %v365
        %v471 = vpop.f32.mrf.mxu0
        %v472 = vadd.f32 %v387, %v471
        %v473 = vpop.f32.mrf.mxu0
        %v474 = vpop.f32.mrf.mxu0
        %v475 = vpop.f32.mrf.mxu0
        %476 = vdwg.mxu0
        %477 = vst [vmem:[%s249] sm:$0xff] %v472
        %p478 = scmp.lt.s32.totalorder %s18, 1
        %s479 = scalar_select %p478, %s18, 1
        %s480 = smul.addr %s479, 8
        %s481 = scalar_lea.vmem %s5, %s480
        // Predicated region
        $region49: #{_feed_forward_impl.1} parent=39 // pred_check
          %p482 = pneg %p146
        $region50: #{_feed_forward_impl.1} parent=39 // pred_check_branch
          %484 = sbr.rel (%p482) target = $region52
        $region51: #{_feed_forward_impl.1} parent=39 // pred_region
          _
        $region52: #{_feed_forward_impl.1} parent=39 // pred_fallthru
          _
      $region40: #{_feed_forward_impl.1} parent=5 // pred_fallthru
        _
      %p485 = scmp.le.s32.totalorder 2, %s13
      // Predicated region
      $region53: #{_feed_forward_impl.1} parent=5 // pred_check
        %p486 = pneg %p485
      $region54: #{_feed_forward_impl.1} parent=5 // pred_check_branch
        %488 = sbr.rel (%p486) target = $region56
      $region55: #{_feed_forward_impl.1} parent=5 // pred_region
        %s489 = ssub.s32 %s13, 2
        // Predicated region
        $region57: #{_feed_forward_impl.1} parent=55 // pred_check
          %p490 = pneg %p152
        $region58: #{_feed_forward_impl.1} parent=55 // pred_check_branch
          %492 = sbr.rel (%p490) target = $region60
        $region59: #{_feed_forward_impl.1} parent=55 // pred_region
          %p493 = scmp.lt.s32.totalorder %s19, 1
          %s494 = scalar_select %p493, %s19, 1
          %s495 = smul.addr %s494, 8
          %s496 = scalar_lea.vmem %s5, %s495
        $region60: #{_feed_forward_impl.1} parent=55 // pred_fallthru
          _
      $region56: #{_feed_forward_impl.1} parent=5 // pred_fallthru
        _
    $region6: #{_feed_forward_impl.1} parent=1 // loop_footer
      %s17 = sadd.s32 1, %s13
    $region7: #{_feed_forward_impl.1} parent=1 // loop_footer_branch
      %12 = sbr.rel target = $region3
    $region8: #{_feed_forward_impl.1} parent=1 // loop_exit
      _
    %497 = vsyncpa [#allocation3], 1
    %s498 = scalar_lea.sflag [#allocation3], 1
    %499 = vsyncpa %s498, 1
    %500 = vsyncpa [#allocation5], 1

</llo_original>
